<compile_context>
chip_gen: v5e
topology: v5e:2x2
jax: 0.10.0
libtpu: 0.0.40
codegen_flags: <defaults>
</compile_context>

<pallas_src>
import functools

import jax
import jax.numpy as jnp
from jax import lax
from jax.experimental import pallas as pl
from jax.experimental.pallas import tpu as pltpu


def attention_kernel(xq_ref, xkv_ref, wq_ref, wkv_ref, wo_ref, o_ref,
                     q_scr, k_scr, v_scr, m_scr, l_scr, acc_scr, ctx_scr):
    """One grid step = (batch b, q-tile qi, kv-tile ki); ki is the inner axis.

    xq_ref  : (1, Tq, E) f32   x rows for this q tile
    xkv_ref : (1, Tk, E) f32   x rows for this kv tile
    wq_ref  : (E, H*D)   bf16  Wq^T with softmax scale folded in
    wkv_ref : (E, 2*H*D) bf16  [Wk^T | Wv^T]
    wo_ref  : (H*D, E)   bf16  Wo^T
    o_ref   : (1, Tq, E) f32
    scratch : q (H,Tq,D) bf16, k/v (H,Tk,D) bf16, m/l (H,Tq,1) f32,
              acc (H,Tq,D) f32, ctx (Tq,H*D) bf16
    """
    H, _, D = acc_scr.shape
    HD = H * D
    ki = pl.program_id(2)
    nk = pl.num_programs(2)

    # --- new q tile: project Q once (full-width matmul) and reset flash state.
    @pl.when(ki == 0)
    def _init():
        xq = xq_ref[0].astype(jnp.bfloat16)                             # (Tq, E)
        q2d = jnp.dot(xq, wq_ref[...],
                      preferred_element_type=jnp.float32).astype(jnp.bfloat16)  # (Tq, HD)
        for h in range(H):                                              # head-major columns
            q_scr[h] = q2d[:, h * D:(h + 1) * D]
        m_scr[...] = jnp.full(m_scr.shape, -jnp.inf, dtype=m_scr.dtype)
        l_scr[...] = jnp.zeros(l_scr.shape, dtype=l_scr.dtype)
        acc_scr[...] = jnp.zeros(acc_scr.shape, dtype=acc_scr.dtype)

    # --- project K and V for this kv tile with one fused full-width matmul.
    xkv = xkv_ref[0].astype(jnp.bfloat16)                               # (Tk, E)
    kv2d = jnp.dot(xkv, wkv_ref[...],
                   preferred_element_type=jnp.float32).astype(jnp.bfloat16)     # (Tk, 2*HD)
    for h in range(H):
        k_scr[h] = kv2d[:, h * D:(h + 1) * D]
        v_scr[h] = kv2d[:, HD + h * D:HD + (h + 1) * D]

    q3 = q_scr[...]                                                     # (H, Tq, D) bf16
    k3 = k_scr[...]                                                     # (H, Tk, D) bf16
    v3 = v_scr[...]                                                     # (H, Tk, D) bf16

    # logits[h, i, j] = q[h, i, :] . k[h, j, :]   (scale already folded in Wq)
    logits = lax.dot_general(q3, k3, (((2,), (2,)), ((0,), (0,))),
                             preferred_element_type=jnp.float32)        # (H, Tq, Tk)

    # --- online softmax update (f32 statistics).
    m_prev = m_scr[...]
    m_new = jnp.maximum(m_prev, jnp.max(logits, axis=-1, keepdims=True))
    alpha = jnp.exp(m_prev - m_new)                                     # (H, Tq, 1)
    p = jnp.exp(logits - m_new)                                         # (H, Tq, Tk)
    l_scr[...] = alpha * l_scr[...] + jnp.sum(p, axis=-1, keepdims=True)
    pv = lax.dot_general(p.astype(jnp.bfloat16), v3,
                         (((2,), (1,)), ((0,), (0,))),
                         preferred_element_type=jnp.float32)            # (H, Tq, D)
    acc_scr[...] = alpha * acc_scr[...] + pv
    m_scr[...] = m_new

    # --- last kv tile: normalize, repack heads lane-wise, fused output proj.
    @pl.when(ki == nk - 1)
    def _finalize():
        ctx = acc_scr[...] * pl.reciprocal(l_scr[...], approx=False)    # (H, Tq, D) f32
        ctx_b = ctx.astype(jnp.bfloat16)
        for h in range(H):
            ctx_scr[:, pl.ds(h * D, D)] = ctx_b[h]
        out = jnp.dot(ctx_scr[...], wo_ref[...],
                      preferred_element_type=jnp.float32)               # (Tq, E)
        o_ref[0] = out.astype(o_ref.dtype)


def _pick_tile(s, target):
    """Largest tile <= target that divides s and keeps sublanes 8-aligned."""
    if s <= target:
        return s
    t = (target // 8) * 8
    while t >= 8:
        if s % t == 0:
            return t
        t -= 8
    return s


def attention_forward(x, wq, wk, wv, wo, num_heads, q_tile=None, kv_tile=None):
    """Pallas multi-head attention.

    x : (B, S, E) float32
    wq, wk, wv, wo : (E, E) float32, PyTorch nn.Linear layout (out, in).
    """
    B, S, E = x.shape
    assert E % num_heads == 0
    H = num_heads
    D = E // H
    HD = H * D
    scale = float(D) ** -0.5

    if q_tile is None:
        q_tile = _pick_tile(S, 512)
    if kv_tile is None:
        kv_tile = _pick_tile(S, 512)
    assert S % q_tile == 0 and S % kv_tile == 0, "S must be divisible by tiles"
    assert q_tile == S or q_tile % 8 == 0
    assert kv_tile == S or kv_tile % 8 == 0

    # Host-side weight prep: nn.Linear does x @ W.T, so pre-transpose to
    # (in, out); '(h d)' output columns are head-major; fold scale into Wq;
    # fuse Wk|Wv into one matrix so K/V come from a single matmul; bf16 weights.
    wq_p = (wq.T * scale).astype(jnp.bfloat16)                          # (E, HD)
    wkv_p = jnp.concatenate([wk.T, wv.T], axis=1).astype(jnp.bfloat16)  # (E, 2*HD)
    wo_p = wo.T.astype(jnp.bfloat16)                                    # (HD, E)

    # VMEM budget: ~3/4 of physical, capped at 96 MiB (≈48 MiB on v7x's 64 MiB).
    try:
        info = pltpu.get_tpu_info()
        vmem_phys = int(getattr(info, "vmem_capacity_bytes", 128 * 1024 * 1024))
    except Exception:
        vmem_phys = 128 * 1024 * 1024
    vmem_limit = min(vmem_phys * 3 // 4, 96 * 1024 * 1024)

    grid = (B, S // q_tile, S // kv_tile)

    return pl.pallas_call(
        attention_kernel,
        out_shape=jax.ShapeDtypeStruct((B, S, E), x.dtype),
        grid_spec=pltpu.PrefetchScalarGridSpec(
            num_scalar_prefetch=0,
            grid=grid,
            in_specs=[
                pl.BlockSpec((1, q_tile, E), lambda b, qi, ki: (b, qi, 0)),   # x (Q rows)
                pl.BlockSpec((1, kv_tile, E), lambda b, qi, ki: (b, ki, 0)),  # x (K/V rows)
                pl.BlockSpec((E, HD), lambda b, qi, ki: (0, 0)),              # Wq^T (scaled)
                pl.BlockSpec((E, 2 * HD), lambda b, qi, ki: (0, 0)),          # Wk^T | Wv^T
                pl.BlockSpec((HD, E), lambda b, qi, ki: (0, 0)),              # Wo^T
            ],
            out_specs=pl.BlockSpec((1, q_tile, E), lambda b, qi, ki: (b, qi, 0)),
            scratch_shapes=[
                pltpu.VMEM((H, q_tile, D), jnp.bfloat16),    # q, per head
                pltpu.VMEM((H, kv_tile, D), jnp.bfloat16),   # k, per head
                pltpu.VMEM((H, kv_tile, D), jnp.bfloat16),   # v, per head
                pltpu.VMEM((H, q_tile, 1), jnp.float32),     # running max
                pltpu.VMEM((H, q_tile, 1), jnp.float32),     # running denom
                pltpu.VMEM((H, q_tile, D), jnp.float32),     # output accumulator
                pltpu.VMEM((q_tile, HD), jnp.bfloat16),      # head-concat ctx
            ],
        ),
        compiler_params=pltpu.CompilerParams(
            dimension_semantics=("parallel", "parallel", "arbitrary"),
            vmem_limit_bytes=vmem_limit,
        ),
    )(x, x, wq_p, wkv_p, wo_p)


def attention_reference(x, wq, wk, wv, wo, num_heads):
    """Pure-JAX f32 reference mirroring the PyTorch forward exactly."""
    B, S, E = x.shape
    D = E // num_heads
    scale = float(D) ** -0.5
    q = x @ wq.T
    k = x @ wk.T
    v = x @ wv.T
    # 'b seq (h d) -> b h seq d'
    q = q.reshape(B, S, num_heads, D).transpose(0, 2, 1, 3)
    k = k.reshape(B, S, num_heads, D).transpose(0, 2, 1, 3)
    v = v.reshape(B, S, num_heads, D).transpose(0, 2, 1, 3)
    logits = jnp.einsum('bhqd,bhkd->bhqk', q, k) * scale
    attn = jax.nn.softmax(logits, axis=-1)
    out = jnp.einsum('bhqk,bhkd->bhqd', attn, v)
    out = out.transpose(0, 2, 1, 3).reshape(B, S, E)
    return out @ wo.T


if __name__ == "__main__":
    B, S, E, H = 2, 16, 32, 4

    key = jax.random.PRNGKey(0)
    kx, kq, kk, kv, ko = jax.random.split(key, 5)

    x = jax.random.normal(kx, (B, S, E), dtype=jnp.float32)
    # nn.Linear-style weights, shape (out_features, in_features).
    winit = 1.0 / (E ** 0.5)
    wq = jax.random.uniform(kq, (E, E), jnp.float32, -winit, winit)
    wk = jax.random.uniform(kk, (E, E), jnp.float32, -winit, winit)
    wv = jax.random.uniform(kv, (E, E), jnp.float32, -winit, winit)
    wo = jax.random.uniform(ko, (E, E), jnp.float32, -winit, winit)

    # q_tile/kv_tile = 8 on S=16 exercises the multi-tile flash accumulation.
    out = attention_forward(x, wq, wk, wv, wo, num_heads=H, q_tile=8, kv_tile=8)
    out = jax.block_until_ready(out)

    ref = attention_reference(x, wq, wk, wv, wo, num_heads=H)
    assert out.shape == (B, S, E)
    # bf16 MXU operands -> looser tolerance than pure f32.
    assert jnp.allclose(out, ref, atol=2e-2, rtol=2e-2), (
        f"mismatch vs reference, max abs diff = {jnp.max(jnp.abs(out - ref))}")

    print("KERNEL_OK")
</pallas_src>

<mosaic_0001>
module attributes {stable_mosaic.version = 11 : i64} {
  func.func @attention_kernel(%arg0: i32, %arg1: i32, %arg2: i32, %arg3: memref<1x8x32xf32, #tpu.memory_space<vmem>>, %arg4: memref<1x8x32xf32, #tpu.memory_space<vmem>>, %arg5: memref<32x32xbf16, #tpu.memory_space<vmem>>, %arg6: memref<32x64xbf16, #tpu.memory_space<vmem>>, %arg7: memref<32x32xbf16, #tpu.memory_space<vmem>>, %arg8: memref<1x8x32xf32, #tpu.memory_space<vmem>>, %arg9: memref<4x8x8xbf16, #tpu.memory_space<vmem>>, %arg10: memref<4x8x8xbf16, #tpu.memory_space<vmem>>, %arg11: memref<4x8x8xbf16, #tpu.memory_space<vmem>>, %arg12: memref<4x8x1xf32, #tpu.memory_space<vmem>>, %arg13: memref<4x8x1xf32, #tpu.memory_space<vmem>>, %arg14: memref<4x8x8xf32, #tpu.memory_space<vmem>>, %arg15: memref<8x32xbf16, #tpu.memory_space<vmem>>) attributes {dimension_semantics = [#tpu.dimension_semantics<parallel>, #tpu.dimension_semantics<parallel>, #tpu.dimension_semantics<arbitrary>], iteration_bounds = array<i64: 2, 2, 2>, scalar_prefetch = 0 : i64, scratch_operands = 7 : i64, tpu.core_type = #tpu.core_type<tc>, window_params = [{transform_indices = @transform_0, window_bounds = array<i64: 1, 8, 32>}, {transform_indices = @transform_1, window_bounds = array<i64: 1, 8, 32>}, {pipeline_mode = #tpu.pipeline_mode<synchronous>, transform_indices = @transform_2, window_bounds = array<i64: 32, 32>}, {pipeline_mode = #tpu.pipeline_mode<synchronous>, transform_indices = @transform_3, window_bounds = array<i64: 32, 64>}, {pipeline_mode = #tpu.pipeline_mode<synchronous>, transform_indices = @transform_4, window_bounds = array<i64: 32, 32>}, {transform_indices = @transform_5, window_bounds = array<i64: 1, 8, 32>}]} {
    %c0_i32 = arith.constant 0 : i32
    %0 = arith.cmpi eq, %arg2, %c0_i32 : i32
    %1 = arith.extui %0 : i1 to i32
    %c0_i32_0 = arith.constant 0 : i32
    %2 = arith.cmpi ne, %1, %c0_i32_0 : i32
    scf.if %2 {
      %c0_58 = arith.constant 0 : index
      %c0_59 = arith.constant 0 : index
      %c0_60 = arith.constant 0 : index
      %71 = vector.load %arg3[%c0_58, %c0_59, %c0_60] : memref<1x8x32xf32, #tpu.memory_space<vmem>>, vector<1x8x32xf32>
      %72 = vector.shape_cast %71 : vector<1x8x32xf32> to vector<8x32xf32>
      %73 = arith.truncf %72 : vector<8x32xf32> to vector<8x32xbf16>
      %c0_61 = arith.constant 0 : index
      %c0_62 = arith.constant 0 : index
      %74 = vector.load %arg5[%c0_61, %c0_62] : memref<32x32xbf16, #tpu.memory_space<vmem>>, vector<32x32xbf16>
      %cst_63 = arith.constant dense<0.000000e+00> : vector<8x32xf32>
      %75 = tpu.matmul %73, %74, %cst_63 {dimension_numbers = #tpu.dot_dimension_numbers<[1], [0], [0], [1], [0, 0, 1, 1], [], []>} : vector<8x32xbf16>, vector<32x32xbf16>, vector<8x32xf32> -> vector<8x32xf32>
      %76 = arith.truncf %75 : vector<8x32xf32> to vector<8x32xbf16>
      %77 = vector.extract_strided_slice %76 {offsets = [0, 0], sizes = [8, 8], strides = [1, 1]} : vector<8x32xbf16> to vector<8x8xbf16>
      %c0_64 = arith.constant 0 : index
      %c0_65 = arith.constant 0 : index
      %c0_66 = arith.constant 0 : index
      %78 = vector.load %arg9[%c0_64, %c0_65, %c0_66] : memref<4x8x8xbf16, #tpu.memory_space<vmem>>, vector<1x8x8xbf16>
      %79 = vector.shape_cast %78 : vector<1x8x8xbf16> to vector<8x8xbf16>
      %80 = vector.shape_cast %77 : vector<8x8xbf16> to vector<1x8x8xbf16>
      tpu.vector_store %arg9[%c0_64, %c0_65, %c0_66], %80 {strides = array<i32>} : memref<4x8x8xbf16, #tpu.memory_space<vmem>>, vector<1x8x8xbf16>,
      %81 = vector.extract_strided_slice %76 {offsets = [0, 8], sizes = [8, 8], strides = [1, 1]} : vector<8x32xbf16> to vector<8x8xbf16>
      %c1_67 = arith.constant 1 : index
      %c0_68 = arith.constant 0 : index
      %c0_69 = arith.constant 0 : index
      %82 = vector.load %arg9[%c1_67, %c0_68, %c0_69] : memref<4x8x8xbf16, #tpu.memory_space<vmem>>, vector<1x8x8xbf16>
      %83 = vector.shape_cast %82 : vector<1x8x8xbf16> to vector<8x8xbf16>
      %84 = vector.shape_cast %81 : vector<8x8xbf16> to vector<1x8x8xbf16>
      tpu.vector_store %arg9[%c1_67, %c0_68, %c0_69], %84 {strides = array<i32>} : memref<4x8x8xbf16, #tpu.memory_space<vmem>>, vector<1x8x8xbf16>,
      %85 = vector.extract_strided_slice %76 {offsets = [0, 16], sizes = [8, 8], strides = [1, 1]} : vector<8x32xbf16> to vector<8x8xbf16>
      %c2_70 = arith.constant 2 : index
      %c0_71 = arith.constant 0 : index
      %c0_72 = arith.constant 0 : index
      %86 = vector.load %arg9[%c2_70, %c0_71, %c0_72] : memref<4x8x8xbf16, #tpu.memory_space<vmem>>, vector<1x8x8xbf16>
      %87 = vector.shape_cast %86 : vector<1x8x8xbf16> to vector<8x8xbf16>
      %88 = vector.shape_cast %85 : vector<8x8xbf16> to vector<1x8x8xbf16>
      tpu.vector_store %arg9[%c2_70, %c0_71, %c0_72], %88 {strides = array<i32>} : memref<4x8x8xbf16, #tpu.memory_space<vmem>>, vector<1x8x8xbf16>,
      %89 = vector.extract_strided_slice %76 {offsets = [0, 24], sizes = [8, 8], strides = [1, 1]} : vector<8x32xbf16> to vector<8x8xbf16>
      %c3_73 = arith.constant 3 : index
      %c0_74 = arith.constant 0 : index
      %c0_75 = arith.constant 0 : index
      %90 = vector.load %arg9[%c3_73, %c0_74, %c0_75] : memref<4x8x8xbf16, #tpu.memory_space<vmem>>, vector<1x8x8xbf16>
      %91 = vector.shape_cast %90 : vector<1x8x8xbf16> to vector<8x8xbf16>
      %92 = vector.shape_cast %89 : vector<8x8xbf16> to vector<1x8x8xbf16>
      tpu.vector_store %arg9[%c3_73, %c0_74, %c0_75], %92 {strides = array<i32>} : memref<4x8x8xbf16, #tpu.memory_space<vmem>>, vector<1x8x8xbf16>,
      %cst_76 = arith.constant 0xFF800000 : f32
      %93 = vector.broadcast %cst_76 : f32 to vector<4x8x1xf32>
      %c0_77 = arith.constant 0 : index
      %c0_78 = arith.constant 0 : index
      %c0_79 = arith.constant 0 : index
      %94 = vector.load %arg12[%c0_77, %c0_78, %c0_79] : memref<4x8x1xf32, #tpu.memory_space<vmem>>, vector<4x8x1xf32>
      tpu.vector_store %arg12[%c0_77, %c0_78, %c0_79], %93 {strides = array<i32>} : memref<4x8x1xf32, #tpu.memory_space<vmem>>, vector<4x8x1xf32>,
      %cst_80 = arith.constant 0.000000e+00 : f32
      %95 = vector.broadcast %cst_80 : f32 to vector<4x8x1xf32>
      %c0_81 = arith.constant 0 : index
      %c0_82 = arith.constant 0 : index
      %c0_83 = arith.constant 0 : index
      %96 = vector.load %arg13[%c0_81, %c0_82, %c0_83] : memref<4x8x1xf32, #tpu.memory_space<vmem>>, vector<4x8x1xf32>
      tpu.vector_store %arg13[%c0_81, %c0_82, %c0_83], %95 {strides = array<i32>} : memref<4x8x1xf32, #tpu.memory_space<vmem>>, vector<4x8x1xf32>,
      %cst_84 = arith.constant 0.000000e+00 : f32
      %97 = vector.broadcast %cst_84 : f32 to vector<4x8x8xf32>
      %c0_85 = arith.constant 0 : index
      %c0_86 = arith.constant 0 : index
      %c0_87 = arith.constant 0 : index
      %98 = vector.load %arg14[%c0_85, %c0_86, %c0_87] : memref<4x8x8xf32, #tpu.memory_space<vmem>>, vector<4x8x8xf32>
      tpu.vector_store %arg14[%c0_85, %c0_86, %c0_87], %97 {strides = array<i32>} : memref<4x8x8xf32, #tpu.memory_space<vmem>>, vector<4x8x8xf32>,
    } else {
    }
    %c0 = arith.constant 0 : index
    %c0_1 = arith.constant 0 : index
    %c0_2 = arith.constant 0 : index
    %3 = vector.load %arg4[%c0, %c0_1, %c0_2] : memref<1x8x32xf32, #tpu.memory_space<vmem>>, vector<1x8x32xf32>
    %4 = vector.shape_cast %3 : vector<1x8x32xf32> to vector<8x32xf32>
    %5 = arith.truncf %4 : vector<8x32xf32> to vector<8x32xbf16>
    %c0_3 = arith.constant 0 : index
    %c0_4 = arith.constant 0 : index
    %6 = vector.load %arg6[%c0_3, %c0_4] : memref<32x64xbf16, #tpu.memory_space<vmem>>, vector<32x64xbf16>
    %cst = arith.constant dense<0.000000e+00> : vector<8x64xf32>
    %7 = tpu.matmul %5, %6, %cst {dimension_numbers = #tpu.dot_dimension_numbers<[1], [0], [0], [1], [0, 0, 1, 1], [], []>} : vector<8x32xbf16>, vector<32x64xbf16>, vector<8x64xf32> -> vector<8x64xf32>
    %8 = arith.truncf %7 : vector<8x64xf32> to vector<8x64xbf16>
    %9 = vector.extract_strided_slice %8 {offsets = [0, 0], sizes = [8, 8], strides = [1, 1]} : vector<8x64xbf16> to vector<8x8xbf16>
    %c0_5 = arith.constant 0 : index
    %c0_6 = arith.constant 0 : index
    %c0_7 = arith.constant 0 : index
    %10 = vector.load %arg10[%c0_5, %c0_6, %c0_7] : memref<4x8x8xbf16, #tpu.memory_space<vmem>>, vector<1x8x8xbf16>
    %11 = vector.shape_cast %10 : vector<1x8x8xbf16> to vector<8x8xbf16>
    %12 = vector.shape_cast %9 : vector<8x8xbf16> to vector<1x8x8xbf16>
    tpu.vector_store %arg10[%c0_5, %c0_6, %c0_7], %12 {strides = array<i32>} : memref<4x8x8xbf16, #tpu.memory_space<vmem>>, vector<1x8x8xbf16>,
    %13 = vector.extract_strided_slice %8 {offsets = [0, 32], sizes = [8, 8], strides = [1, 1]} : vector<8x64xbf16> to vector<8x8xbf16>
    %c0_8 = arith.constant 0 : index
    %c0_9 = arith.constant 0 : index
    %c0_10 = arith.constant 0 : index
    %14 = vector.load %arg11[%c0_8, %c0_9, %c0_10] : memref<4x8x8xbf16, #tpu.memory_space<vmem>>, vector<1x8x8xbf16>
    %15 = vector.shape_cast %14 : vector<1x8x8xbf16> to vector<8x8xbf16>
    %16 = vector.shape_cast %13 : vector<8x8xbf16> to vector<1x8x8xbf16>
    tpu.vector_store %arg11[%c0_8, %c0_9, %c0_10], %16 {strides = array<i32>} : memref<4x8x8xbf16, #tpu.memory_space<vmem>>, vector<1x8x8xbf16>,
    %17 = vector.extract_strided_slice %8 {offsets = [0, 8], sizes = [8, 8], strides = [1, 1]} : vector<8x64xbf16> to vector<8x8xbf16>
    %c1 = arith.constant 1 : index
    %c0_11 = arith.constant 0 : index
    %c0_12 = arith.constant 0 : index
    %18 = vector.load %arg10[%c1, %c0_11, %c0_12] : memref<4x8x8xbf16, #tpu.memory_space<vmem>>, vector<1x8x8xbf16>
    %19 = vector.shape_cast %18 : vector<1x8x8xbf16> to vector<8x8xbf16>
    %20 = vector.shape_cast %17 : vector<8x8xbf16> to vector<1x8x8xbf16>
    tpu.vector_store %arg10[%c1, %c0_11, %c0_12], %20 {strides = array<i32>} : memref<4x8x8xbf16, #tpu.memory_space<vmem>>, vector<1x8x8xbf16>,
    %21 = vector.extract_strided_slice %8 {offsets = [0, 40], sizes = [8, 8], strides = [1, 1]} : vector<8x64xbf16> to vector<8x8xbf16>
    %c1_13 = arith.constant 1 : index
    %c0_14 = arith.constant 0 : index
    %c0_15 = arith.constant 0 : index
    %22 = vector.load %arg11[%c1_13, %c0_14, %c0_15] : memref<4x8x8xbf16, #tpu.memory_space<vmem>>, vector<1x8x8xbf16>
    %23 = vector.shape_cast %22 : vector<1x8x8xbf16> to vector<8x8xbf16>
    %24 = vector.shape_cast %21 : vector<8x8xbf16> to vector<1x8x8xbf16>
    tpu.vector_store %arg11[%c1_13, %c0_14, %c0_15], %24 {strides = array<i32>} : memref<4x8x8xbf16, #tpu.memory_space<vmem>>, vector<1x8x8xbf16>,
    %25 = vector.extract_strided_slice %8 {offsets = [0, 16], sizes = [8, 8], strides = [1, 1]} : vector<8x64xbf16> to vector<8x8xbf16>
    %c2 = arith.constant 2 : index
    %c0_16 = arith.constant 0 : index
    %c0_17 = arith.constant 0 : index
    %26 = vector.load %arg10[%c2, %c0_16, %c0_17] : memref<4x8x8xbf16, #tpu.memory_space<vmem>>, vector<1x8x8xbf16>
    %27 = vector.shape_cast %26 : vector<1x8x8xbf16> to vector<8x8xbf16>
    %28 = vector.shape_cast %25 : vector<8x8xbf16> to vector<1x8x8xbf16>
    tpu.vector_store %arg10[%c2, %c0_16, %c0_17], %28 {strides = array<i32>} : memref<4x8x8xbf16, #tpu.memory_space<vmem>>, vector<1x8x8xbf16>,
    %29 = vector.extract_strided_slice %8 {offsets = [0, 48], sizes = [8, 8], strides = [1, 1]} : vector<8x64xbf16> to vector<8x8xbf16>
    %c2_18 = arith.constant 2 : index
    %c0_19 = arith.constant 0 : index
    %c0_20 = arith.constant 0 : index
    %30 = vector.load %arg11[%c2_18, %c0_19, %c0_20] : memref<4x8x8xbf16, #tpu.memory_space<vmem>>, vector<1x8x8xbf16>
    %31 = vector.shape_cast %30 : vector<1x8x8xbf16> to vector<8x8xbf16>
    %32 = vector.shape_cast %29 : vector<8x8xbf16> to vector<1x8x8xbf16>
    tpu.vector_store %arg11[%c2_18, %c0_19, %c0_20], %32 {strides = array<i32>} : memref<4x8x8xbf16, #tpu.memory_space<vmem>>, vector<1x8x8xbf16>,
    %33 = vector.extract_strided_slice %8 {offsets = [0, 24], sizes = [8, 8], strides = [1, 1]} : vector<8x64xbf16> to vector<8x8xbf16>
    %c3 = arith.constant 3 : index
    %c0_21 = arith.constant 0 : index
    %c0_22 = arith.constant 0 : index
    %34 = vector.load %arg10[%c3, %c0_21, %c0_22] : memref<4x8x8xbf16, #tpu.memory_space<vmem>>, vector<1x8x8xbf16>
    %35 = vector.shape_cast %34 : vector<1x8x8xbf16> to vector<8x8xbf16>
    %36 = vector.shape_cast %33 : vector<8x8xbf16> to vector<1x8x8xbf16>
    tpu.vector_store %arg10[%c3, %c0_21, %c0_22], %36 {strides = array<i32>} : memref<4x8x8xbf16, #tpu.memory_space<vmem>>, vector<1x8x8xbf16>,
    %37 = vector.extract_strided_slice %8 {offsets = [0, 56], sizes = [8, 8], strides = [1, 1]} : vector<8x64xbf16> to vector<8x8xbf16>
    %c3_23 = arith.constant 3 : index
    %c0_24 = arith.constant 0 : index
    %c0_25 = arith.constant 0 : index
    %38 = vector.load %arg11[%c3_23, %c0_24, %c0_25] : memref<4x8x8xbf16, #tpu.memory_space<vmem>>, vector<1x8x8xbf16>
    %39 = vector.shape_cast %38 : vector<1x8x8xbf16> to vector<8x8xbf16>
    %40 = vector.shape_cast %37 : vector<8x8xbf16> to vector<1x8x8xbf16>
    tpu.vector_store %arg11[%c3_23, %c0_24, %c0_25], %40 {strides = array<i32>} : memref<4x8x8xbf16, #tpu.memory_space<vmem>>, vector<1x8x8xbf16>,
    %c0_26 = arith.constant 0 : index
    %c0_27 = arith.constant 0 : index
    %c0_28 = arith.constant 0 : index
    %41 = vector.load %arg9[%c0_26, %c0_27, %c0_28] : memref<4x8x8xbf16, #tpu.memory_space<vmem>>, vector<4x8x8xbf16>
    %c0_29 = arith.constant 0 : index
    %c0_30 = arith.constant 0 : index
    %c0_31 = arith.constant 0 : index
    %42 = vector.load %arg10[%c0_29, %c0_30, %c0_31] : memref<4x8x8xbf16, #tpu.memory_space<vmem>>, vector<4x8x8xbf16>
    %c0_32 = arith.constant 0 : index
    %c0_33 = arith.constant 0 : index
    %c0_34 = arith.constant 0 : index
    %43 = vector.load %arg11[%c0_32, %c0_33, %c0_34] : memref<4x8x8xbf16, #tpu.memory_space<vmem>>, vector<4x8x8xbf16>
    %cst_35 = arith.constant dense<0.000000e+00> : vector<4x8x8xf32>
    %44 = tpu.matmul %41, %42, %cst_35 {dimension_numbers = #tpu.dot_dimension_numbers<[2], [2], [1], [1], [0, 0, 0, 1, 1, 1], [0], [0]>} : vector<4x8x8xbf16>, vector<4x8x8xbf16>, vector<4x8x8xf32> -> vector<4x8x8xf32>
    %c0_36 = arith.constant 0 : index
    %c0_37 = arith.constant 0 : index
    %c0_38 = arith.constant 0 : index
    %45 = vector.load %arg12[%c0_36, %c0_37, %c0_38] : memref<4x8x1xf32, #tpu.memory_space<vmem>>, vector<4x8x1xf32>
    %cst_39 = arith.constant dense<0xFF800000> : vector<4x8xf32>
    %46 = vector.multi_reduction <maximumf>, %44, %cst_39 [2] : vector<4x8x8xf32> to vector<4x8xf32>
    %47 = vector.shape_cast %46 : vector<4x8xf32> to vector<4x8x1xf32>
    %48 = arith.maximumf %45, %47 : vector<4x8x1xf32>
    %49 = arith.subf %45, %48 : vector<4x8x1xf32>
    %50 = math.exp %49 : vector<4x8x1xf32>
    %51 = vector.broadcast %48 : vector<4x8x1xf32> to vector<4x8x8xf32>
    %52 = arith.subf %44, %51 : vector<4x8x8xf32>
    %53 = math.exp %52 : vector<4x8x8xf32>
    %c0_40 = arith.constant 0 : index
    %c0_41 = arith.constant 0 : index
    %c0_42 = arith.constant 0 : index
    %54 = vector.load %arg13[%c0_40, %c0_41, %c0_42] : memref<4x8x1xf32, #tpu.memory_space<vmem>>, vector<4x8x1xf32>
    %55 = arith.mulf %50, %54 : vector<4x8x1xf32>
    %cst_43 = arith.constant dense<0.000000e+00> : vector<4x8xf32>
    %56 = vector.multi_reduction <add>, %53, %cst_43 [2] : vector<4x8x8xf32> to vector<4x8xf32>
    %57 = vector.shape_cast %56 : vector<4x8xf32> to vector<4x8x1xf32>
    %58 = arith.addf %55, %57 : vector<4x8x1xf32>
    %c0_44 = arith.constant 0 : index
    %c0_45 = arith.constant 0 : index
    %c0_46 = arith.constant 0 : index
    %59 = vector.load %arg13[%c0_44, %c0_45, %c0_46] : memref<4x8x1xf32, #tpu.memory_space<vmem>>, vector<4x8x1xf32>
    tpu.vector_store %arg13[%c0_44, %c0_45, %c0_46], %58 {strides = array<i32>} : memref<4x8x1xf32, #tpu.memory_space<vmem>>, vector<4x8x1xf32>,
    %60 = arith.truncf %53 : vector<4x8x8xf32> to vector<4x8x8xbf16>
    %cst_47 = arith.constant dense<0.000000e+00> : vector<4x8x8xf32>
    %61 = tpu.matmul %60, %43, %cst_47 {dimension_numbers = #tpu.dot_dimension_numbers<[2], [1], [1], [2], [0, 0, 0, 1, 1, 2], [0], [0]>} : vector<4x8x8xbf16>, vector<4x8x8xbf16>, vector<4x8x8xf32> -> vector<4x8x8xf32>
    %c0_48 = arith.constant 0 : index
    %c0_49 = arith.constant 0 : index
    %c0_50 = arith.constant 0 : index
    %62 = vector.load %arg14[%c0_48, %c0_49, %c0_50] : memref<4x8x8xf32, #tpu.memory_space<vmem>>, vector<4x8x8xf32>
    %63 = vector.broadcast %50 : vector<4x8x1xf32> to vector<4x8x8xf32>
    %64 = arith.mulf %63, %62 : vector<4x8x8xf32>
    %65 = arith.addf %64, %61 : vector<4x8x8xf32>
    %c0_51 = arith.constant 0 : index
    %c0_52 = arith.constant 0 : index
    %c0_53 = arith.constant 0 : index
    %66 = vector.load %arg14[%c0_51, %c0_52, %c0_53] : memref<4x8x8xf32, #tpu.memory_space<vmem>>, vector<4x8x8xf32>
    tpu.vector_store %arg14[%c0_51, %c0_52, %c0_53], %65 {strides = array<i32>} : memref<4x8x8xf32, #tpu.memory_space<vmem>>, vector<4x8x8xf32>,
    %c0_54 = arith.constant 0 : index
    %c0_55 = arith.constant 0 : index
    %c0_56 = arith.constant 0 : index
    %67 = vector.load %arg12[%c0_54, %c0_55, %c0_56] : memref<4x8x1xf32, #tpu.memory_space<vmem>>, vector<4x8x1xf32>
    tpu.vector_store %arg12[%c0_54, %c0_55, %c0_56], %48 {strides = array<i32>} : memref<4x8x1xf32, #tpu.memory_space<vmem>>, vector<4x8x1xf32>,
    %c1_i32 = arith.constant 1 : i32
    %68 = arith.cmpi eq, %arg2, %c1_i32 : i32
    %69 = arith.extui %68 : i1 to i32
    %c0_i32_57 = arith.constant 0 : i32
    %70 = arith.cmpi ne, %69, %c0_i32_57 : i32
    scf.if %70 {
      %c0_58 = arith.constant 0 : index
      %c0_59 = arith.constant 0 : index
      %c0_60 = arith.constant 0 : index
      %71 = vector.load %arg14[%c0_58, %c0_59, %c0_60] : memref<4x8x8xf32, #tpu.memory_space<vmem>>, vector<4x8x8xf32>
      %c0_61 = arith.constant 0 : index
      %c0_62 = arith.constant 0 : index
      %c0_63 = arith.constant 0 : index
      %72 = vector.load %arg13[%c0_61, %c0_62, %c0_63] : memref<4x8x1xf32, #tpu.memory_space<vmem>>, vector<4x8x1xf32>
      %73 = tpu.reciprocal %72 : vector<4x8x1xf32> -> vector<4x8x1xf32>
      %74 = vector.broadcast %73 : vector<4x8x1xf32> to vector<4x8x8xf32>
      %75 = arith.mulf %71, %74 : vector<4x8x8xf32>
      %76 = arith.truncf %75 : vector<4x8x8xf32> to vector<4x8x8xbf16>
      %77 = vector.extract_strided_slice %76 {offsets = [0, 0, 0], sizes = [1, 8, 8], strides = [1, 1, 1]} : vector<4x8x8xbf16> to vector<1x8x8xbf16>
      %78 = vector.shape_cast %77 : vector<1x8x8xbf16> to vector<8x8xbf16>
      %c0_64 = arith.constant 0 : index
      %c0_65 = arith.constant 0 : index
      %79 = vector.load %arg15[%c0_64, %c0_65] : memref<8x32xbf16, #tpu.memory_space<vmem>>, vector<8x8xbf16>
      tpu.vector_store %arg15[%c0_64, %c0_65], %78 {strides = array<i32>} : memref<8x32xbf16, #tpu.memory_space<vmem>>, vector<8x8xbf16>,
      %80 = vector.extract_strided_slice %76 {offsets = [1, 0, 0], sizes = [1, 8, 8], strides = [1, 1, 1]} : vector<4x8x8xbf16> to vector<1x8x8xbf16>
      %81 = vector.shape_cast %80 : vector<1x8x8xbf16> to vector<8x8xbf16>
      %c0_66 = arith.constant 0 : index
      %c8 = arith.constant 8 : index
      %82 = vector.load %arg15[%c0_66, %c8] : memref<8x32xbf16, #tpu.memory_space<vmem>>, vector<8x8xbf16>
      tpu.vector_store %arg15[%c0_66, %c8], %81 {strides = array<i32>} : memref<8x32xbf16, #tpu.memory_space<vmem>>, vector<8x8xbf16>,
      %83 = vector.extract_strided_slice %76 {offsets = [2, 0, 0], sizes = [1, 8, 8], strides = [1, 1, 1]} : vector<4x8x8xbf16> to vector<1x8x8xbf16>
      %84 = vector.shape_cast %83 : vector<1x8x8xbf16> to vector<8x8xbf16>
      %c0_67 = arith.constant 0 : index
      %c16 = arith.constant 16 : index
      %85 = vector.load %arg15[%c0_67, %c16] : memref<8x32xbf16, #tpu.memory_space<vmem>>, vector<8x8xbf16>
      tpu.vector_store %arg15[%c0_67, %c16], %84 {strides = array<i32>} : memref<8x32xbf16, #tpu.memory_space<vmem>>, vector<8x8xbf16>,
      %86 = vector.extract_strided_slice %76 {offsets = [3, 0, 0], sizes = [1, 8, 8], strides = [1, 1, 1]} : vector<4x8x8xbf16> to vector<1x8x8xbf16>
      %87 = vector.shape_cast %86 : vector<1x8x8xbf16> to vector<8x8xbf16>
      %c0_68 = arith.constant 0 : index
      %c24 = arith.constant 24 : index
      %88 = vector.load %arg15[%c0_68, %c24] : memref<8x32xbf16, #tpu.memory_space<vmem>>, vector<8x8xbf16>
      tpu.vector_store %arg15[%c0_68, %c24], %87 {strides = array<i32>} : memref<8x32xbf16, #tpu.memory_space<vmem>>, vector<8x8xbf16>,
      %c0_69 = arith.constant 0 : index
      %c0_70 = arith.constant 0 : index
      %89 = vector.load %arg15[%c0_69, %c0_70] : memref<8x32xbf16, #tpu.memory_space<vmem>>, vector<8x32xbf16>
      %c0_71 = arith.constant 0 : index
      %c0_72 = arith.constant 0 : index
      %90 = vector.load %arg7[%c0_71, %c0_72] : memref<32x32xbf16, #tpu.memory_space<vmem>>, vector<32x32xbf16>
      %cst_73 = arith.constant dense<0.000000e+00> : vector<8x32xf32>
      %91 = tpu.matmul %89, %90, %cst_73 {dimension_numbers = #tpu.dot_dimension_numbers<[1], [0], [0], [1], [0, 0, 1, 1], [], []>} : vector<8x32xbf16>, vector<32x32xbf16>, vector<8x32xf32> -> vector<8x32xf32>
      %c0_74 = arith.constant 0 : index
      %c0_75 = arith.constant 0 : index
      %c0_76 = arith.constant 0 : index
      %92 = vector.load %arg8[%c0_74, %c0_75, %c0_76] : memref<1x8x32xf32, #tpu.memory_space<vmem>>, vector<1x8x32xf32>
      %93 = vector.shape_cast %92 : vector<1x8x32xf32> to vector<8x32xf32>
      %94 = vector.shape_cast %91 : vector<8x32xf32> to vector<1x8x32xf32>
      tpu.vector_store %arg8[%c0_74, %c0_75, %c0_76], %94 {strides = array<i32>} : memref<1x8x32xf32, #tpu.memory_space<vmem>>, vector<1x8x32xf32>,
    } else {
    }
    return
  }
  func.func @transform_0(%arg0: i32, %arg1: i32, %arg2: i32) -> (i32, i32, i32) {
    %c0_i32 = arith.constant 0 : i32
    %c0_i32_0 = arith.constant 0 : i32
    return %arg0, %arg1, %c0_i32 : i32, i32, i32
  }
  func.func @transform_1(%arg0: i32, %arg1: i32, %arg2: i32) -> (i32, i32, i32) {
    %c0_i32 = arith.constant 0 : i32
    %c0_i32_0 = arith.constant 0 : i32
    return %arg0, %arg2, %c0_i32 : i32, i32, i32
  }
  func.func @transform_2(%arg0: i32, %arg1: i32, %arg2: i32) -> (i32, i32) {
    %c0_i32 = arith.constant 0 : i32
    %c0_i32_0 = arith.constant 0 : i32
    %c0_i32_1 = arith.constant 0 : i32
    return %c0_i32, %c0_i32_0 : i32, i32
  }
  func.func @transform_3(%arg0: i32, %arg1: i32, %arg2: i32) -> (i32, i32) {
    %c0_i32 = arith.constant 0 : i32
    %c0_i32_0 = arith.constant 0 : i32
    %c0_i32_1 = arith.constant 0 : i32
    return %c0_i32, %c0_i32_0 : i32, i32
  }
  func.func @transform_4(%arg0: i32, %arg1: i32, %arg2: i32) -> (i32, i32) {
    %c0_i32 = arith.constant 0 : i32
    %c0_i32_0 = arith.constant 0 : i32
    %c0_i32_1 = arith.constant 0 : i32
    return %c0_i32, %c0_i32_0 : i32, i32
  }
  func.func @transform_5(%arg0: i32, %arg1: i32, %arg2: i32) -> (i32, i32, i32) {
    %c0_i32 = arith.constant 0 : i32
    %c0_i32_0 = arith.constant 0 : i32
    return %arg0, %arg1, %c0_i32 : i32, i32, i32
  }
}

</mosaic_0001>

<llo_original>
// kernel: tpu_custom_call.1
$region0: #{tpu_custom_call.1}
  #allocation0 [shape = 'u32[]', space=smem, size = 0x4, offset = 0x4, fixed_abs, tag = 'smem constant byte address 0x4 - core index']
  #allocation1 [shape = 'u32[72,128]{1,0:T(1,128)}', space=vmem, size = 0x9000, scoped, tag = 'internal scratch']
  #allocation2 [shape = 'bf16[4,8,8]{2,1,0:T(8,128)(2,1)}', space=vmem, size = 0x2000, scoped, tag = 'scratch operand']
  #allocation3 [shape = 'bf16[4,8,8]{2,1,0:T(8,128)(2,1)}', space=vmem, size = 0x2000, scoped, tag = 'scratch operand']
  #allocation4 [shape = 'bf16[4,8,8]{2,1,0:T(8,128)(2,1)}', space=vmem, size = 0x2000, scoped, tag = 'scratch operand']
  #allocation5 [shape = 'f32[4,8,1]{2,1,0:T(8,128)}', space=vmem, size = 0x4000, scoped, tag = 'scratch operand']
  #allocation6 [shape = 'f32[4,8,1]{2,1,0:T(8,128)}', space=vmem, size = 0x4000, scoped, tag = 'scratch operand']
  #allocation7 [shape = 'f32[4,8,8]{2,1,0:T(8,128)}', space=vmem, size = 0x4000, scoped, tag = 'scratch operand']
  #allocation8 [shape = 'bf16[8,32]{1,0:T(8,128)(2,1)}', space=vmem, size = 0x800, scoped, tag = 'scratch operand']
  %s0 = inlined_call_operand.hbm [shape: f32[2,16,32], index: 0, kind: input, shape index: {}]
  %s1 = inlined_call_operand.hbm [shape: f32[2,16,32], index: 1, kind: input, shape index: {}]
  %s2 = inlined_call_operand.hbm [shape: bf16[32,32], index: 2, kind: input, shape index: {}]
  %s3 = inlined_call_operand.hbm [shape: bf16[32,64], index: 3, kind: input, shape index: {}]
  %s4 = inlined_call_operand.hbm [shape: bf16[32,32], index: 4, kind: input, shape index: {}]
  %s5 = inlined_call_operand.hbm [shape: f32[2,16,32], index: 5, kind: output, shape index: {}]
  %s6 = sld [smem:[#allocation0]]
  $region81: #{tpu_custom_call.1} parent=0
    _
  %s8 = ssub.s32 1, %s6
  %s9 = scalar_select 0, %s8, %s6
  $region1: #{tpu_custom_call.1} parent=0
    #allocation9 [shape = 'u8[8192]{0}', space=vmem, size = 0x2000, scoped, tag = 'input window, operand 0']
    #allocation10 [shape = 's32[2]{0}', space=sflag, size = 0x8, scoped, tag = 'scoped memory for tpu_custom_call.1']
    #allocation11 [shape = 's32[2]{0}', space=sflag, size = 0x8, scoped, tag = 'scoped memory for tpu_custom_call.1']
    #allocation12 [shape = 'u8[8192]{0}', space=vmem, size = 0x2000, scoped, tag = 'input window, operand 1']
    #allocation13 [shape = 's32[2]{0}', space=sflag, size = 0x8, scoped, tag = 'scoped memory for tpu_custom_call.1']
    #allocation14 [shape = 'u8[8192]{0}', space=vmem, size = 0x2000, scoped, tag = 'input window, operand 2, single buffered']
    #allocation15 [shape = 'u8[8192]{0}', space=vmem, size = 0x2000, scoped, tag = 'input window, operand 3, single buffered']
    #allocation16 [shape = 's32[1]{0}', space=sflag, size = 0x4, scoped, tag = 'scoped memory for tpu_custom_call.1']
    #allocation17 [shape = 'u8[8192]{0}', space=vmem, size = 0x2000, scoped, tag = 'input window, operand 4, single buffered']
    #allocation18 [shape = 'u8[8192]{0}', space=vmem, size = 0x2000, scoped, tag = 'output window, operand 0']
    %10 = vsyncpa [#allocation10], 0
    %s11 = scalar_lea.sflag [#allocation10], 1
    %12 = vsyncpa %s11, 0
    %13 = vsyncpa [#allocation13], 0
    %s14 = scalar_lea.sflag [#allocation13], 1
    %15 = vsyncpa %s14, 0
    %16 = vsyncpa [#allocation16], 0
    %17 = vsyncpa [#allocation11], 0
    %s18 = scalar_lea.sflag [#allocation11], 1
    %19 = vsyncpa %s18, 0
    loop: start=0, step=1, limit=10
    $region2: #{tpu_custom_call.1} parent=1 // loop_pre_header
      _
    $region3: #{tpu_custom_call.1} parent=1 // loop_header
      %s21 = sphi 0, %s25
      %p22 = scmp.ge.s32.totalorder %s21, 10
      %s28 = sphi 0, %s47
      %s29 = sphi 0, %s43
      %s30 = sphi 0, %s39
      %s31 = sphi 0, %s28
      %s32 = sphi 0, %s29
      %s33 = sphi 0, %s30
      %s34 = sphi 0, %s31
      %s35 = sphi 0, %s32
      %s36 = sphi 0, %s33
      %s52 = sphi 0, %s54
      %s55 = sphi 0, %s52
      %s56 = sphi 0, %s55
      %s72 = sphi 0, %s56
      %s80 = sphi 0, %s82
      %s83 = sphi 0, %s80
      %s84 = sphi 0, %s83
      %s100 = sphi 0, %s84
      %s104 = sphi 0, %s104
      %s106 = sphi 0, %s104
      %s107 = sphi 0, %s106
      %s121 = sphi 0, %s107
      %s125 = sphi 0, %s125
      %s127 = sphi 0, %s125
      %s128 = sphi 0, %s127
      %s142 = sphi 0, %s128
      %s146 = sphi 0, %s146
      %s148 = sphi 0, %s146
      %s149 = sphi 0, %s148
      %s163 = sphi 0, %s149
      %s171 = sphi 0, %s173
      %s174 = sphi 0, %s171
      %s175 = sphi 0, %s174
      %s191 = sphi 0, %s175
    $region4: #{tpu_custom_call.1} parent=1 // loop_header_branch
      %24 = sbr.rel (%p22) target = $region8
    $region5: #{tpu_custom_call.1} parent=1 // loop_body
      %s26 = ssub.s32 %s21, 1
      %s27 = ssub.s32 %s21, 2
      %s37 = sadd.s32 1, %s30
      %p38 = scmp.ge.s32.totalorder %s37, 2
      %s39 = scalar_select %p38, 0, %s37
      %s40 = sadd.s32 1, %s29
      %s41 = scalar_select %p38, %s40, %s29
      %p42 = scmp.ge.s32.totalorder %s41, 2
      %s43 = scalar_select %p42, 0, %s41
      %s44 = sadd.s32 1, %s28
      %s45 = scalar_select %p42, %s44, %s28
      %p46 = scmp.ge.s32.totalorder %s45, 2
      %s47 = scalar_select %p46, 0, %s45
      %s48 = ssub.s32 %s28, %s47
      %s49 = ssub.s32 %s29, %s43
      %s50 = sor.u32 %s48, %s49
      %p51 = scmp.eq.s32.totalorder %s50, 0
      %s53 = sadd.s32 %s52, 1
      %s54 = scalar_select %p51, %s52, %s53
      %p57 = pneg %p51
      %p58 = scmp.eq.s32.totalorder %s21, 7
      %p59 = por %p57, %p58
      %p60 = scmp.ne.s32.totalorder %s52, %s55
      %p61 = scmp.eq.s32.totalorder %s21, 0
      %p62 = por %p60, %p61
      %p63 = scmp.ne.s32.totalorder %s52, %s55
      %p64 = scmp.eq.s32.totalorder %s26, 7
      %p65 = por %p63, %p64
      %p66 = scmp.ne.s32.totalorder %s55, %s56
      %p67 = scmp.eq.s32.totalorder %s26, 0
      %p68 = por %p66, %p67
      %p69 = scmp.ne.s32.totalorder %s55, %s56
      %p70 = scmp.eq.s32.totalorder %s27, 7
      %p71 = por %p69, %p70
      %p73 = scmp.ne.s32.totalorder %s56, %s72
      %p74 = scmp.eq.s32.totalorder %s27, 0
      %p75 = por %p73, %p74
      %s76 = ssub.s32 %s28, %s47
      %s77 = ssub.s32 %s30, %s39
      %s78 = sor.u32 %s76, %s77
      %p79 = scmp.eq.s32.totalorder %s78, 0
      %s81 = sadd.s32 %s80, 1
      %s82 = scalar_select %p79, %s80, %s81
      %p85 = pneg %p79
      %p86 = scmp.eq.s32.totalorder %s21, 7
      %p87 = por %p85, %p86
      %p88 = scmp.ne.s32.totalorder %s80, %s83
      %p89 = scmp.eq.s32.totalorder %s21, 0
      %p90 = por %p88, %p89
      %p91 = scmp.ne.s32.totalorder %s80, %s83
      %p92 = scmp.eq.s32.totalorder %s26, 7
      %p93 = por %p91, %p92
      %p94 = scmp.ne.s32.totalorder %s83, %s84
      %p95 = scmp.eq.s32.totalorder %s26, 0
      %p96 = por %p94, %p95
      %p97 = scmp.ne.s32.totalorder %s83, %s84
      %p98 = scmp.eq.s32.totalorder %s27, 7
      %p99 = por %p97, %p98
      %p101 = scmp.ne.s32.totalorder %s84, %s100
      %p102 = scmp.eq.s32.totalorder %s27, 0
      %p103 = por %p101, %p102
      %s105 = sadd.s32 %s104, 1
      %p108 = scmp.eq.s32.totalorder %s21, 7
      %p109 = scmp.ne.s32.totalorder %s104, %s106
      %p110 = scmp.eq.s32.totalorder %s21, 0
      %p111 = por %p109, %p110
      %p112 = scmp.ne.s32.totalorder %s104, %s106
      %p113 = scmp.eq.s32.totalorder %s26, 7
      %p114 = por %p112, %p113
      %p115 = scmp.ne.s32.totalorder %s106, %s107
      %p116 = scmp.eq.s32.totalorder %s26, 0
      %p117 = por %p115, %p116
      %p118 = scmp.ne.s32.totalorder %s106, %s107
      %p119 = scmp.eq.s32.totalorder %s27, 7
      %p120 = por %p118, %p119
      %p122 = scmp.ne.s32.totalorder %s107, %s121
      %p123 = scmp.eq.s32.totalorder %s27, 0
      %p124 = por %p122, %p123
      %s126 = sadd.s32 %s125, 1
      %p129 = scmp.eq.s32.totalorder %s21, 7
      %p130 = scmp.ne.s32.totalorder %s125, %s127
      %p131 = scmp.eq.s32.totalorder %s21, 0
      %p132 = por %p130, %p131
      %p133 = scmp.ne.s32.totalorder %s125, %s127
      %p134 = scmp.eq.s32.totalorder %s26, 7
      %p135 = por %p133, %p134
      %p136 = scmp.ne.s32.totalorder %s127, %s128
      %p137 = scmp.eq.s32.totalorder %s26, 0
      %p138 = por %p136, %p137
      %p139 = scmp.ne.s32.totalorder %s127, %s128
      %p140 = scmp.eq.s32.totalorder %s27, 7
      %p141 = por %p139, %p140
      %p143 = scmp.ne.s32.totalorder %s128, %s142
      %p144 = scmp.eq.s32.totalorder %s27, 0
      %p145 = por %p143, %p144
      %s147 = sadd.s32 %s146, 1
      %p150 = scmp.eq.s32.totalorder %s21, 7
      %p151 = scmp.ne.s32.totalorder %s146, %s148
      %p152 = scmp.eq.s32.totalorder %s21, 0
      %p153 = por %p151, %p152
      %p154 = scmp.ne.s32.totalorder %s146, %s148
      %p155 = scmp.eq.s32.totalorder %s26, 7
      %p156 = por %p154, %p155
      %p157 = scmp.ne.s32.totalorder %s148, %s149
      %p158 = scmp.eq.s32.totalorder %s26, 0
      %p159 = por %p157, %p158
      %p160 = scmp.ne.s32.totalorder %s148, %s149
      %p161 = scmp.eq.s32.totalorder %s27, 7
      %p162 = por %p160, %p161
      %p164 = scmp.ne.s32.totalorder %s149, %s163
      %p165 = scmp.eq.s32.totalorder %s27, 0
      %p166 = por %p164, %p165
      %s167 = ssub.s32 %s28, %s47
      %s168 = ssub.s32 %s29, %s43
      %s169 = sor.u32 %s167, %s168
      %p170 = scmp.eq.s32.totalorder %s169, 0
      %s172 = sadd.s32 %s171, 1
      %s173 = scalar_select %p170, %s171, %s172
      %p176 = pneg %p170
      %p177 = scmp.eq.s32.totalorder %s21, 7
      %p178 = por %p176, %p177
      %p179 = scmp.ne.s32.totalorder %s171, %s174
      %p180 = scmp.eq.s32.totalorder %s21, 0
      %p181 = por %p179, %p180
      %p182 = scmp.ne.s32.totalorder %s171, %s174
      %p183 = scmp.eq.s32.totalorder %s26, 7
      %p184 = por %p182, %p183
      %p185 = scmp.ne.s32.totalorder %s174, %s175
      %p186 = scmp.eq.s32.totalorder %s26, 0
      %p187 = por %p185, %p186
      %p188 = scmp.ne.s32.totalorder %s174, %s175
      %p189 = scmp.eq.s32.totalorder %s27, 7
      %p190 = por %p188, %p189
      %p192 = scmp.ne.s32.totalorder %s175, %s191
      %p193 = scmp.eq.s32.totalorder %s27, 0
      %p194 = por %p192, %p193
      %p195 = scmp.le.s32.totalorder 1, %s21
      %p196 = scmp.lt.s32.totalorder %s21, 9
      %p197 = pnand %p195, %p196
      %p198 = pneg %p197
      // Predicated region
      $region9: #{tpu_custom_call.1} parent=5 // pred_check
        _
      $region10: #{tpu_custom_call.1} parent=5 // pred_check_branch
        %200 = sbr.rel (%p197) target = $region12
      $region11: #{tpu_custom_call.1} parent=5 // pred_region
        %s201 = ssub.s32 %s21, 1
        // Predicated region
        $region13: #{tpu_custom_call.1} parent=11 // pred_check
          %p202 = pneg %p117
        $region14: #{tpu_custom_call.1} parent=11 // pred_check_branch
          %204 = sbr.rel (%p202) target = $region16
        $region15: #{tpu_custom_call.1} parent=11 // pred_region
          %206 = vsyncadd [#allocation13], 0
          %s207 = sshll.u32 %s2, 4
          %s208 = int_to_ptr.hbm [resolvable:$true] %s207
          %s209 = sshll.u32 [#allocation14], 4
          %s210 = int_to_ptr.vmem [resolvable:$true] %s209
          %215 = dma.hbm_to_vmem [thread:$0]  %s208, 256, %s210, [#allocation13], 64, 64, 4
        $region16: #{tpu_custom_call.1} parent=11 // pred_fallthru
          _
        // Predicated region
        $region17: #{tpu_custom_call.1} parent=11 // pred_check
          %p216 = pneg %p138
        $region18: #{tpu_custom_call.1} parent=11 // pred_check_branch
          %218 = sbr.rel (%p216) target = $region20
        $region19: #{tpu_custom_call.1} parent=11 // pred_region
          %220 = vsyncadd [#allocation16], 0
          %s221 = sshll.u32 %s3, 4
          %s222 = int_to_ptr.hbm [resolvable:$true] %s221
          %s223 = sshll.u32 [#allocation15], 4
          %s224 = int_to_ptr.vmem [resolvable:$true] %s223
          %229 = dma.hbm_to_vmem [thread:$0]  %s222, 256, %s224, [#allocation16], 64, 64, 4
        $region20: #{tpu_custom_call.1} parent=11 // pred_fallthru
          _
        // Predicated region
        $region21: #{tpu_custom_call.1} parent=11 // pred_check
          %p230 = pneg %p159
        $region22: #{tpu_custom_call.1} parent=11 // pred_check_branch
          %232 = sbr.rel (%p230) target = $region24
        $region23: #{tpu_custom_call.1} parent=11 // pred_region
          %234 = vsyncadd [#allocation16], 0
          %s235 = sshll.u32 %s4, 4
          %s236 = int_to_ptr.hbm [resolvable:$true] %s235
          %s237 = sshll.u32 [#allocation17], 4
          %s238 = int_to_ptr.vmem [resolvable:$true] %s237
          %243 = dma.hbm_to_vmem [thread:$0]  %s236, 256, %s238, [#allocation16], 64, 64, 4
        $region24: #{tpu_custom_call.1} parent=11 // pred_fallthru
          _
      $region12: #{tpu_custom_call.1} parent=5 // pred_fallthru
        _
      %p244 = scmp.lt.s32.totalorder %s21, 8
      // Predicated region
      $region25: #{tpu_custom_call.1} parent=5 // pred_check
        %p245 = pneg %p244
      $region26: #{tpu_custom_call.1} parent=5 // pred_check_branch
        %247 = sbr.rel (%p245) target = $region28
      $region27: #{tpu_custom_call.1} parent=5 // pred_region
        // Predicated region
        $region29: #{tpu_custom_call.1} parent=27 // pred_check
          %p248 = pneg %p62
        $region30: #{tpu_custom_call.1} parent=27 // pred_check_branch
          %250 = sbr.rel (%p248) target = $region32
        $region31: #{tpu_custom_call.1} parent=27 // pred_region
          %s251 = sand.u32 %s52, 1
          %s252 = scalar_lea.sflag [#allocation10], %s251
          %s253 = sand.u32 %s52, 1
          %s254 = smul.addr %s253, 8
          %s255 = scalar_lea.vmem [#allocation9], %s254
          %257 = vsyncadd %s252, 0
          %s258 = smul.addr %s28, 2
          %s259 = sadd.s32 %s29, %s258
          %s260 = smul.addr %s259, 8
          %s261 = scalar_lea.hbm %s0, %s260
          %s263 = sshll.u32 %s261, 4
          %s264 = int_to_ptr.hbm [resolvable:$true] %s263
          %s265 = sshll.u32 %s255, 4
          %s266 = int_to_ptr.vmem [resolvable:$true] %s265
          %268 = dma.hbm_to_vmem [thread:$0]  %s264, 128, %s266, %s252
        $region32: #{tpu_custom_call.1} parent=27 // pred_fallthru
          _
        // Predicated region
        $region33: #{tpu_custom_call.1} parent=27 // pred_check
          %p269 = pneg %p90
        $region34: #{tpu_custom_call.1} parent=27 // pred_check_branch
          %271 = sbr.rel (%p269) target = $region36
        $region35: #{tpu_custom_call.1} parent=27 // pred_region
          %s272 = sand.u32 %s21, 1
          %s273 = scalar_lea.sflag [#allocation13], %s272
          %s274 = sand.u32 %s80, 1
          %s275 = smul.addr %s274, 8
          %s276 = scalar_lea.vmem [#allocation12], %s275
          %278 = vsyncadd %s273, 0
          %s279 = smul.addr %s28, 2
          %s280 = sadd.s32 %s30, %s279
          %s281 = smul.addr %s280, 8
          %s282 = scalar_lea.hbm %s1, %s281
          %s284 = sshll.u32 %s282, 4
          %s285 = int_to_ptr.hbm [resolvable:$true] %s284
          %s286 = sshll.u32 %s276, 4
          %s287 = int_to_ptr.vmem [resolvable:$true] %s286
          %289 = dma.hbm_to_vmem [thread:$0]  %s285, 128, %s287, %s273
        $region36: #{tpu_custom_call.1} parent=27 // pred_fallthru
          _
      $region28: #{tpu_custom_call.1} parent=5 // pred_fallthru
        _
      %p290 = scmp.le.s32.totalorder 1, %s21
      %p291 = scmp.lt.s32.totalorder %s21, 9
      %p292 = pnand %p290, %p291
      %p293 = pneg %p292
      // Predicated region
      $region37: #{tpu_custom_call.1} parent=5 // pred_check
        _
      $region38: #{tpu_custom_call.1} parent=5 // pred_check_branch
        %295 = sbr.rel (%p292) target = $region40
      $region39: #{tpu_custom_call.1} parent=5 // pred_region
        %s296 = ssub.s32 %s21, 1
        %s297 = sand.u32 %s55, 1
        %s298 = scalar_lea.sflag [#allocation10], %s297
        %s299 = sand.u32 %s55, 1
        %s300 = smul.addr %s299, 8
        %s301 = scalar_lea.vmem [#allocation9], %s300
        // Predicated region
        $region41: #{tpu_custom_call.1} parent=39 // pred_check
          %p302 = pneg %p68
        $region42: #{tpu_custom_call.1} parent=39 // pred_check_branch
          %304 = sbr.rel (%p302) target = $region44
        $region43: #{tpu_custom_call.1} parent=39 // pred_region
          %306 = dma.done %s298, 128
        $region44: #{tpu_custom_call.1} parent=39 // pred_fallthru
          _
        %s307 = sand.u32 %s26, 1
        %s308 = scalar_lea.sflag [#allocation13], %s307
        %s309 = sand.u32 %s83, 1
        %s310 = smul.addr %s309, 8
        %s311 = scalar_lea.vmem [#allocation12], %s310
        // Predicated region
        $region45: #{tpu_custom_call.1} parent=39 // pred_check
          %p312 = pneg %p96
        $region46: #{tpu_custom_call.1} parent=39 // pred_check_branch
          %314 = sbr.rel (%p312) target = $region48
        $region47: #{tpu_custom_call.1} parent=39 // pred_region
          %316 = dma.done %s308, 128
        $region48: #{tpu_custom_call.1} parent=39 // pred_fallthru
          _
        // Predicated region
        $region49: #{tpu_custom_call.1} parent=39 // pred_check
          %p317 = pneg %p117
        $region50: #{tpu_custom_call.1} parent=39 // pred_check_branch
          %319 = sbr.rel (%p317) target = $region52
        $region51: #{tpu_custom_call.1} parent=39 // pred_region
          %321 = dma.done [#allocation13], 256
        $region52: #{tpu_custom_call.1} parent=39 // pred_fallthru
          _
        // Predicated region
        $region53: #{tpu_custom_call.1} parent=39 // pred_check
          %p322 = pneg %p138
        $region54: #{tpu_custom_call.1} parent=39 // pred_check_branch
          %324 = sbr.rel (%p322) target = $region56
        $region55: #{tpu_custom_call.1} parent=39 // pred_region
          %326 = dma.done [#allocation16], 256
        $region56: #{tpu_custom_call.1} parent=39 // pred_fallthru
          _
        // Predicated region
        $region57: #{tpu_custom_call.1} parent=39 // pred_check
          %p327 = pneg %p159
        $region58: #{tpu_custom_call.1} parent=39 // pred_check_branch
          %329 = sbr.rel (%p327) target = $region60
        $region59: #{tpu_custom_call.1} parent=39 // pred_region
          %331 = dma.done [#allocation16], 256
        $region60: #{tpu_custom_call.1} parent=39 // pred_fallthru
          _
        %s332 = sand.u32 %s55, 1
        %s333 = scalar_lea.sflag [#allocation10], %s332
        %s334 = sand.u32 %s55, 1
        %s335 = smul.addr %s334, 8
        %s336 = scalar_lea.vmem [#allocation9], %s335
        %p337 = pneg %p68
        %p338 = pneg %p65
        %s339 = sand.u32 %s26, 1
        %s340 = scalar_lea.sflag [#allocation13], %s339
        %s341 = sand.u32 %s83, 1
        %s342 = smul.addr %s341, 8
        %s343 = scalar_lea.vmem [#allocation12], %s342
        %p344 = pneg %p96
        %p345 = pneg %p93
        %p346 = pneg %p117
        %p347 = pneg %p114
        %p348 = pneg %p138
        %p349 = pneg %p135
        %p350 = pneg %p159
        %p351 = pneg %p156
        %p352 = pneg %p187
        %p353 = pneg %p184
        %s354 = sand.u32 %s174, 1
        %s355 = scalar_lea.sflag [#allocation11], %s354
        %s356 = sand.u32 %s174, 1
        %s357 = smul.addr %s356, 8
        %s358 = scalar_lea.vmem [#allocation18], %s357
        %p360 = scmp.eq.s32.totalorder %s33, 0
        // Predicated region
        $region61: #{tpu_custom_call.1} parent=39 // pred_check
          %p361 = pneg %p360
        $region62: #{tpu_custom_call.1} parent=39 // pred_check_branch
          %363 = sbr.rel (%p361) target = $region64
        $region63: #{tpu_custom_call.1} parent=39 // pred_region
          %v364 = vld [vmem:[%s301] sm:$0xff]
          %v365 = vpack.c.bf16 %v364, %v364
          %v366 = vld [vmem:[#allocation14] sm:$0xf]
          %v367 = vld [vmem:[#allocation14 + $0x4] sm:$0xf]
          %v368 = vld [vmem:[#allocation14 + $0x8] sm:$0xf]
          %v369 = vld [vmem:[#allocation14 + $0xc] sm:$0xf]
          %v374 = vunpack.c.l.b16 %v366
          %v375 = vunpack.c.l.b16 %v367
          %v376 = vunpack.c.l.b16 %v368
          %v377 = vunpack.c.l.b16 %v369
          %v378 = vpack.c.b16 %v375, %v374
          %v379 = vpack.c.b16 %v377, %v376
          %vm382 = vcmask 261120
          %v384 = vsel %vm382, %v365, 0
          %386 = vmatpush.bf16.msra.mxu0 0
          %387 = vmatpush.bf16.msra.mxu0 0
          %388 = vmatpush.bf16.msra.mxu0 0
          %389 = vmatpush.bf16.msra.mxu0 0
          %390 = vmatpush.bf16.msra.mxu0 0
          %391 = vmatpush.bf16.msra.mxu0 0
          %392 = vmatpush.bf16.msra.mxu0 %v379
          %393 = vmatpush.bf16.msra.mxu0 %v378
          %394 = vmatmul.bf16.gmra.mxu0 %v384
          %v395 = vpop.f32.mrf.mxu0
          %v396 = vadd.f32 0.0, %v395
          %v397 = vpop.f32.mrf.mxu0
          %398 = vdwg.mxu0
          %v399 = vpack.c.bf16 %v396, %v396
          %vm400 = vcmask 60416
          %401 = vst.msk [vmem:[#allocation2] sm:$0xf] %vm400, %v399
          %403 = vrot.lane.b32.xlu0 %v399, 120
          %v404 = vpop.permute.xlu0 %403
          %s406 = scalar_lea.vmem [#allocation2], 4
          %407 = vst.msk [vmem:[%s406] sm:$0xf] %vm400, %v404
          %408 = vrot.lane.b32.xlu0 %v399, 112
          %v409 = vpop.permute.xlu0 %408
          %s411 = scalar_lea.vmem [#allocation2], 8
          %412 = vst.msk [vmem:[%s411] sm:$0xf] %vm400, %v409
          %413 = vrot.lane.b32.xlu0 %v399, 104
          %v414 = vpop.permute.xlu0 %413
          %s416 = scalar_lea.vmem [#allocation2], 12
          %417 = vst.msk [vmem:[%s416] sm:$0xf] %vm400, %v414
          %vm418 = vcmask 7168
          %419 = vst.msk [vmem:[#allocation5] sm:$0xff] %vm418, -inf
          %420 = vst.msk [vmem:[#allocation5 + $0x8] sm:$0xff] %vm418, -inf
          %421 = vst.msk [vmem:[#allocation5 + $0x10] sm:$0xff] %vm418, -inf
          %422 = vst.msk [vmem:[#allocation5 + $0x18] sm:$0xff] %vm418, -inf
          %423 = vst.msk [vmem:[#allocation6] sm:$0xff] %vm418, 0.0
          %424 = vst.msk [vmem:[#allocation6 + $0x8] sm:$0xff] %vm418, 0.0
          %425 = vst.msk [vmem:[#allocation6 + $0x10] sm:$0xff] %vm418, 0.0
          %426 = vst.msk [vmem:[#allocation6 + $0x18] sm:$0xff] %vm418, 0.0
          %vm427 = vcmask 64512
          %428 = vst.msk [vmem:[#allocation7] sm:$0xff] %vm427, 0.0
          %429 = vst.msk [vmem:[#allocation7 + $0x8] sm:$0xff] %vm427, 0.0
          %430 = vst.msk [vmem:[#allocation7 + $0x10] sm:$0xff] %vm427, 0.0
          %431 = vst.msk [vmem:[#allocation7 + $0x18] sm:$0xff] %vm427, 0.0
        $region64: #{tpu_custom_call.1} parent=39 // pred_fallthru
          _
        %v432 = vld [vmem:[%s311] sm:$0xff]
        %v433 = vpack.c.bf16 %v432, %v432
        %v434 = vld [vmem:[#allocation15] sm:$0xf]
        %v435 = vld [vmem:[#allocation15 + $0x4] sm:$0xf]
        %v436 = vld [vmem:[#allocation15 + $0x8] sm:$0xf]
        %v437 = vld [vmem:[#allocation15 + $0xc] sm:$0xf]
        %v442 = vunpack.c.l.b16 %v434
        %v443 = vunpack.c.l.b16 %v435
        %v444 = vunpack.c.l.b16 %v436
        %v445 = vunpack.c.l.b16 %v437
        %v446 = vpack.c.b16 %v443, %v442
        %v447 = vpack.c.b16 %v445, %v444
        %vm450 = vcmask 261120
        %v452 = vsel %vm450, %v433, 0
        %454 = vmatpush.bf16.msra.mxu0 0
        %455 = vmatpush.bf16.msra.mxu0 0
        %456 = vmatpush.bf16.msra.mxu0 0
        %457 = vmatpush.bf16.msra.mxu0 0
        %458 = vmatpush.bf16.msra.mxu0 0
        %459 = vmatpush.bf16.msra.mxu0 0
        %460 = vmatpush.bf16.msra.mxu0 %v447
        %461 = vmatpush.bf16.msra.mxu0 %v446
        %462 = vmatmul.bf16.gmra.mxu0 %v452
        %v463 = vpop.f32.mrf.mxu0
        %v464 = vadd.f32 0.0, %v463
        %v465 = vpop.f32.mrf.mxu0
        %466 = vdwg.mxu0
        %v467 = vpack.c.bf16 %v464, %v464
        %vm468 = vcmask 60416
        %469 = vst.msk [vmem:[#allocation3] sm:$0xf] %vm468, %v467
        %471 = vrot.lane.b32.xlu0 %v467, 96
        %v472 = vpop.permute.xlu0 %471
        %474 = vst.msk [vmem:[#allocation4] sm:$0xf] %vm468, %v472
        %475 = vrot.lane.b32.xlu0 %v467, 120
        %v476 = vpop.permute.xlu0 %475
        %s478 = scalar_lea.vmem [#allocation3], 4
        %479 = vst.msk [vmem:[%s478] sm:$0xf] %vm468, %v476
        %480 = vrot.lane.b32.xlu0 %v467, 88
        %v481 = vpop.permute.xlu0 %480
        %s483 = scalar_lea.vmem [#allocation4], 4
        %484 = vst.msk [vmem:[%s483] sm:$0xf] %vm468, %v481
        %485 = vrot.lane.b32.xlu0 %v467, 112
        %v486 = vpop.permute.xlu0 %485
        %s488 = scalar_lea.vmem [#allocation3], 8
        %489 = vst.msk [vmem:[%s488] sm:$0xf] %vm468, %v486
        %490 = vrot.lane.b32.xlu0 %v467, 80
        %v491 = vpop.permute.xlu0 %490
        %s493 = scalar_lea.vmem [#allocation4], 8
        %494 = vst.msk [vmem:[%s493] sm:$0xf] %vm468, %v491
        %495 = vrot.lane.b32.xlu0 %v467, 104
        %v496 = vpop.permute.xlu0 %495
        %s498 = scalar_lea.vmem [#allocation3], 12
        %499 = vst.msk [vmem:[%s498] sm:$0xf] %vm468, %v496
        %500 = vrot.lane.b32.xlu0 %v467, 72
        %v501 = vpop.permute.xlu0 %500
        %s503 = scalar_lea.vmem [#allocation4], 12
        %504 = vst.msk [vmem:[%s503] sm:$0xf] %vm468, %v501
        %v505 = vld [vmem:[#allocation2] sm:$0xf]
        %v506 = vld [vmem:[#allocation2 + $0x4] sm:$0xf]
        %v507 = vld [vmem:[#allocation2 + $0x8] sm:$0xf]
        %v508 = vld [vmem:[#allocation2 + $0xc] sm:$0xf]
        %v509 = vld [vmem:[#allocation3] sm:$0xf]
        %v510 = vld [vmem:[#allocation3 + $0x4] sm:$0xf]
        %v511 = vld [vmem:[#allocation3 + $0x8] sm:$0xf]
        %v512 = vld [vmem:[#allocation3 + $0xc] sm:$0xf]
        %v513 = vld [vmem:[#allocation4] sm:$0xf]
        %v514 = vld [vmem:[#allocation4 + $0x4] sm:$0xf]
        %v515 = vld [vmem:[#allocation4 + $0x8] sm:$0xf]
        %v516 = vld [vmem:[#allocation4 + $0xc] sm:$0xf]
        %vm517 = vcmask 64512
        %v519 = vsel %vm517, %v505, 0
        %v522 = vsel %vm517, %v509, 0
        %524 = vmatpush.bf16.xpose.msra.mxu0 0
        %525 = vmatpush.bf16.xpose.msra.mxu0 0
        %526 = vmatpush.bf16.xpose.msra.mxu0 0
        %527 = vmatpush.bf16.xpose.msra.mxu0 0
        %528 = vmatpush.bf16.xpose.msra.mxu0 0
        %529 = vmatpush.bf16.xpose.msra.mxu0 0
        %530 = vmatpush.bf16.xpose.msra.mxu0 0
        %531 = vmatpush.bf16.xpose.msra.mxu0 %v522
        %532 = vmatmul.bf16.gmra.mxu0 %v519
        %v533 = vpop.f32.mrf.mxu0
        %v534 = vadd.f32 0.0, %v533
        %v535 = vpop.f32.mrf.mxu0
        %536 = vdwg.mxu0
        %v538 = vsel %vm517, %v506, 0
        %v541 = vsel %vm517, %v510, 0
        %543 = vmatpush.bf16.xpose.msra.mxu0 0
        %544 = vmatpush.bf16.xpose.msra.mxu0 0
        %545 = vmatpush.bf16.xpose.msra.mxu0 0
        %546 = vmatpush.bf16.xpose.msra.mxu0 0
        %547 = vmatpush.bf16.xpose.msra.mxu0 0
        %548 = vmatpush.bf16.xpose.msra.mxu0 0
        %549 = vmatpush.bf16.xpose.msra.mxu0 0
        %550 = vmatpush.bf16.xpose.msra.mxu0 %v541
        %551 = vmatmul.bf16.gmra.mxu0 %v538
        %v552 = vpop.f32.mrf.mxu0
        %v553 = vadd.f32 0.0, %v552
        %v554 = vpop.f32.mrf.mxu0
        %555 = vdwg.mxu0
        %v557 = vsel %vm517, %v507, 0
        %v560 = vsel %vm517, %v511, 0
        %562 = vmatpush.bf16.xpose.msra.mxu0 0
        %563 = vmatpush.bf16.xpose.msra.mxu0 0
        %564 = vmatpush.bf16.xpose.msra.mxu0 0
        %565 = vmatpush.bf16.xpose.msra.mxu0 0
        %566 = vmatpush.bf16.xpose.msra.mxu0 0
        %567 = vmatpush.bf16.xpose.msra.mxu0 0
        %568 = vmatpush.bf16.xpose.msra.mxu0 0
        %569 = vmatpush.bf16.xpose.msra.mxu0 %v560
        %570 = vmatmul.bf16.gmra.mxu0 %v557
        %v571 = vpop.f32.mrf.mxu0
        %v572 = vadd.f32 0.0, %v571
        %v573 = vpop.f32.mrf.mxu0
        %574 = vdwg.mxu0
        %v576 = vsel %vm517, %v508, 0
        %v579 = vsel %vm517, %v512, 0
        %581 = vmatpush.bf16.xpose.msra.mxu0 0
        %582 = vmatpush.bf16.xpose.msra.mxu0 0
        %583 = vmatpush.bf16.xpose.msra.mxu0 0
        %584 = vmatpush.bf16.xpose.msra.mxu0 0
        %585 = vmatpush.bf16.xpose.msra.mxu0 0
        %586 = vmatpush.bf16.xpose.msra.mxu0 0
        %587 = vmatpush.bf16.xpose.msra.mxu0 0
        %588 = vmatpush.bf16.xpose.msra.mxu0 %v579
        %589 = vmatmul.bf16.gmra.mxu0 %v576
        %v590 = vpop.f32.mrf.mxu0
        %v591 = vadd.f32 0.0, %v590
        %v592 = vpop.f32.mrf.mxu0
        %593 = vdwg.mxu0
        %v594 = vld [vmem:[#allocation5] sm:$0xff]
        %v595 = vld [vmem:[#allocation5 + $0x8] sm:$0xff]
        %v596 = vld [vmem:[#allocation5 + $0x10] sm:$0xff]
        %v597 = vld [vmem:[#allocation5 + $0x18] sm:$0xff]
        %v598 = vsel %vm517, %v534, -inf
        %599 = vmax.xlane.f32.xlu0 %v598
        %v600 = vpop.xlane.xlu0 %599
        %v601 = vsel %vm517, %v553, -inf
        %602 = vmax.xlane.f32.xlu0 %v601
        %v603 = vpop.xlane.xlu0 %602
        %v604 = vsel %vm517, %v572, -inf
        %605 = vmax.xlane.f32.xlu0 %v604
        %v606 = vpop.xlane.xlu0 %605
        %v607 = vsel %vm517, %v591, -inf
        %608 = vmax.xlane.f32.xlu0 %v607
        %v609 = vpop.xlane.xlu0 %608
        %v610 = vmax.f32 %v594, %v600
        %v611 = vmax.f32 %v595, %v603
        %v612 = vmax.f32 %v596, %v606
        %v613 = vmax.f32 %v597, %v609
        %v614 = vsub.f32 %v594, %v610
        %v615 = vsub.f32 %v595, %v611
        %v616 = vsub.f32 %v596, %v612
        %v617 = vsub.f32 %v597, %v613
        %v618 = vmul.f32 %v614, 1.442695
        %v619 = vpow.pop %v618
        %v620 = vmul.f32 %v615, 1.442695
        %v621 = vpow.pop %v620
        %v622 = vmul.f32 %v616, 1.442695
        %v623 = vpow.pop %v622
        %v624 = vmul.f32 %v617, 1.442695
        %v625 = vpow.pop %v624
        %627 = vset.pattern.permute.xlu0 0
        %628 = vperm.xlu0 %627, %v610
        %v629 = vpop.permute.xlu0 %628
        %632 = vset.pattern.permute.xlu0 0
        %633 = vperm.xlu0 %632, %v611
        %v634 = vpop.permute.xlu0 %633
        %637 = vset.pattern.permute.xlu0 0
        %638 = vperm.xlu0 %637, %v612
        %v639 = vpop.permute.xlu0 %638
        %642 = vset.pattern.permute.xlu0 0
        %643 = vperm.xlu0 %642, %v613
        %v644 = vpop.permute.xlu0 %643
        %v646 = vsub.f32 %v534, %v629
        %v647 = vsub.f32 %v553, %v634
        %v648 = vsub.f32 %v572, %v639
        %v649 = vsub.f32 %v591, %v644
        %v650 = vmul.f32 %v646, 1.442695
        %v651 = vpow.pop %v650
        %v652 = vmul.f32 %v647, 1.442695
        %v653 = vpow.pop %v652
        %v654 = vmul.f32 %v648, 1.442695
        %v655 = vpow.pop %v654
        %v656 = vmul.f32 %v649, 1.442695
        %v657 = vpow.pop %v656
        %v658 = vld [vmem:[#allocation6] sm:$0xff]
        %v659 = vld [vmem:[#allocation6 + $0x8] sm:$0xff]
        %v660 = vld [vmem:[#allocation6 + $0x10] sm:$0xff]
        %v661 = vld [vmem:[#allocation6 + $0x18] sm:$0xff]
        %v662 = vmul.f32 %v619, %v658
        %v663 = vmul.f32 %v621, %v659
        %v664 = vmul.f32 %v623, %v660
        %v665 = vmul.f32 %v625, %v661
        %v666 = vsel %vm517, %v651, 0.0
        %667 = vadd.xlane.f32.xlu0 %v666
        %v668 = vpop.xlane.xlu0 %667
        %v669 = vsel %vm517, %v653, 0.0
        %670 = vadd.xlane.f32.xlu0 %v669
        %v671 = vpop.xlane.xlu0 %670
        %v672 = vsel %vm517, %v655, 0.0
        %673 = vadd.xlane.f32.xlu0 %v672
        %v674 = vpop.xlane.xlu0 %673
        %v675 = vsel %vm517, %v657, 0.0
        %676 = vadd.xlane.f32.xlu0 %v675
        %v677 = vpop.xlane.xlu0 %676
        %v678 = vadd.f32 %v662, %v668
        %v679 = vadd.f32 %v663, %v671
        %v680 = vadd.f32 %v664, %v674
        %v681 = vadd.f32 %v665, %v677
        %vm682 = vcmask 7168
        %683 = vst.msk [vmem:[#allocation6] sm:$0xff] %vm682, %v678
        %684 = vst.msk [vmem:[#allocation6 + $0x8] sm:$0xff] %vm682, %v679
        %685 = vst.msk [vmem:[#allocation6 + $0x10] sm:$0xff] %vm682, %v680
        %686 = vst.msk [vmem:[#allocation6 + $0x18] sm:$0xff] %vm682, %v681
        %v687 = vpack.c.bf16 %v651, %v651
        %v688 = vpack.c.bf16 %v653, %v653
        %v689 = vpack.c.bf16 %v655, %v655
        %v690 = vpack.c.bf16 %v657, %v657
        %v692 = vsel %vm517, %v687, 0
        %vm694 = vcmask 1043456
        %v696 = vsel %vm694, %v513, 0
        %698 = vmatpush.bf16.msra.mxu0 0
        %699 = vmatpush.bf16.msra.mxu0 0
        %700 = vmatpush.bf16.msra.mxu0 0
        %701 = vmatpush.bf16.msra.mxu0 0
        %702 = vmatpush.bf16.msra.mxu0 0
        %703 = vmatpush.bf16.msra.mxu0 0
        %704 = vmatpush.bf16.msra.mxu0 0
        %705 = vmatpush.bf16.msra.mxu0 %v696
        %706 = vmatmul.bf16.gmra.mxu0 %v692
        %v707 = vpop.f32.mrf.mxu0
        %v708 = vadd.f32 0.0, %v707
        %v709 = vpop.f32.mrf.mxu0
        %710 = vdwg.mxu0
        %v712 = vsel %vm517, %v688, 0
        %v715 = vsel %vm694, %v514, 0
        %717 = vmatpush.bf16.msra.mxu0 0
        %718 = vmatpush.bf16.msra.mxu0 0
        %719 = vmatpush.bf16.msra.mxu0 0
        %720 = vmatpush.bf16.msra.mxu0 0
        %721 = vmatpush.bf16.msra.mxu0 0
        %722 = vmatpush.bf16.msra.mxu0 0
        %723 = vmatpush.bf16.msra.mxu0 0
        %724 = vmatpush.bf16.msra.mxu0 %v715
        %725 = vmatmul.bf16.gmra.mxu0 %v712
        %v726 = vpop.f32.mrf.mxu0
        %v727 = vadd.f32 0.0, %v726
        %v728 = vpop.f32.mrf.mxu0
        %729 = vdwg.mxu0
        %v731 = vsel %vm517, %v689, 0
        %v734 = vsel %vm694, %v515, 0
        %736 = vmatpush.bf16.msra.mxu0 0
        %737 = vmatpush.bf16.msra.mxu0 0
        %738 = vmatpush.bf16.msra.mxu0 0
        %739 = vmatpush.bf16.msra.mxu0 0
        %740 = vmatpush.bf16.msra.mxu0 0
        %741 = vmatpush.bf16.msra.mxu0 0
        %742 = vmatpush.bf16.msra.mxu0 0
        %743 = vmatpush.bf16.msra.mxu0 %v734
        %744 = vmatmul.bf16.gmra.mxu0 %v731
        %v745 = vpop.f32.mrf.mxu0
        %v746 = vadd.f32 0.0, %v745
        %v747 = vpop.f32.mrf.mxu0
        %748 = vdwg.mxu0
        %v750 = vsel %vm517, %v690, 0
        %v753 = vsel %vm694, %v516, 0
        %755 = vmatpush.bf16.msra.mxu0 0
        %756 = vmatpush.bf16.msra.mxu0 0
        %757 = vmatpush.bf16.msra.mxu0 0
        %758 = vmatpush.bf16.msra.mxu0 0
        %759 = vmatpush.bf16.msra.mxu0 0
        %760 = vmatpush.bf16.msra.mxu0 0
        %761 = vmatpush.bf16.msra.mxu0 0
        %762 = vmatpush.bf16.msra.mxu0 %v753
        %763 = vmatmul.bf16.gmra.mxu0 %v750
        %v764 = vpop.f32.mrf.mxu0
        %v765 = vadd.f32 0.0, %v764
        %v766 = vpop.f32.mrf.mxu0
        %767 = vdwg.mxu0
        %v768 = vld [vmem:[#allocation7] sm:$0xff]
        %v769 = vld [vmem:[#allocation7 + $0x8] sm:$0xff]
        %v770 = vld [vmem:[#allocation7 + $0x10] sm:$0xff]
        %v771 = vld [vmem:[#allocation7 + $0x18] sm:$0xff]
        %773 = vset.pattern.permute.xlu0 0
        %774 = vperm.xlu0 %773, %v619
        %v775 = vpop.permute.xlu0 %774
        %778 = vset.pattern.permute.xlu0 0
        %779 = vperm.xlu0 %778, %v621
        %v780 = vpop.permute.xlu0 %779
        %783 = vset.pattern.permute.xlu0 0
        %784 = vperm.xlu0 %783, %v623
        %v785 = vpop.permute.xlu0 %784
        %788 = vset.pattern.permute.xlu0 0
        %789 = vperm.xlu0 %788, %v625
        %v790 = vpop.permute.xlu0 %789
        %v792 = vmul.f32 %v775, %v768
        %v793 = vmul.f32 %v780, %v769
        %v794 = vmul.f32 %v785, %v770
        %v795 = vmul.f32 %v790, %v771
        %v796 = vadd.f32 %v792, %v708
        %v797 = vadd.f32 %v793, %v727
        %v798 = vadd.f32 %v794, %v746
        %v799 = vadd.f32 %v795, %v765
        %800 = vst.msk [vmem:[#allocation7] sm:$0xff] %vm517, %v796
        %801 = vst.msk [vmem:[#allocation7 + $0x8] sm:$0xff] %vm517, %v797
        %802 = vst.msk [vmem:[#allocation7 + $0x10] sm:$0xff] %vm517, %v798
        %803 = vst.msk [vmem:[#allocation7 + $0x18] sm:$0xff] %vm517, %v799
        %804 = vst.msk [vmem:[#allocation5] sm:$0xff] %vm682, %v610
        %805 = vst.msk [vmem:[#allocation5 + $0x8] sm:$0xff] %vm682, %v611
        %806 = vst.msk [vmem:[#allocation5 + $0x10] sm:$0xff] %vm682, %v612
        %807 = vst.msk [vmem:[#allocation5 + $0x18] sm:$0xff] %vm682, %v613
        %p808 = scmp.eq.s32.totalorder %s33, 1
        // Predicated region
        $region65: #{tpu_custom_call.1} parent=39 // pred_check
          %p809 = pneg %p808
        $region66: #{tpu_custom_call.1} parent=39 // pred_check_branch
          %811 = sbr.rel (%p809) target = $region68
        $region67: #{tpu_custom_call.1} parent=39 // pred_region
          %v812 = vld [vmem:[#allocation7] sm:$0xff]
          %v813 = vld [vmem:[#allocation7 + $0x8] sm:$0xff]
          %v814 = vld [vmem:[#allocation7 + $0x10] sm:$0xff]
          %v815 = vld [vmem:[#allocation7 + $0x18] sm:$0xff]
          %v816 = vld [vmem:[#allocation6] sm:$0xff]
          %v817 = vld [vmem:[#allocation6 + $0x8] sm:$0xff]
          %v818 = vld [vmem:[#allocation6 + $0x10] sm:$0xff]
          %v819 = vld [vmem:[#allocation6 + $0x18] sm:$0xff]
          %v820 = vrcp.pop %v816
          %v821 = vmul.f32 %v816, %v820
          %v822 = vsub.f32 1.0, %v821
          %v823 = vmul.f32 %v820, %v822
          %v824 = vadd.f32 %v820, %v823
          %vm825 = vweird.f32 %v816
          %vm826 = vweird.f32 %v820
          %vm827 = vmor %vm825, %vm826
          %v828 = vsel %vm827, %v820, %v824
          %v829 = vand.u32 2147483647, %v816
          %vm830 = vcmp.eq.f32.partialorder %v829, 8.507059e+37
          %v831 = vand.u32 %v816, 2147483648
          %v832 = vor.u32 1.1754944e-38, %v831
          %v833 = vsel %vm830, %v832, %v828
          %v834 = vrcp.pop %v817
          %v835 = vmul.f32 %v817, %v834
          %v836 = vsub.f32 1.0, %v835
          %v837 = vmul.f32 %v834, %v836
          %v838 = vadd.f32 %v834, %v837
          %vm839 = vweird.f32 %v817
          %vm840 = vweird.f32 %v834
          %vm841 = vmor %vm839, %vm840
          %v842 = vsel %vm841, %v834, %v838
          %v843 = vand.u32 2147483647, %v817
          %vm844 = vcmp.eq.f32.partialorder %v843, 8.507059e+37
          %v845 = vand.u32 %v817, 2147483648
          %v846 = vor.u32 1.1754944e-38, %v845
          %v847 = vsel %vm844, %v846, %v842
          %v848 = vrcp.pop %v818
          %v849 = vmul.f32 %v818, %v848
          %v850 = vsub.f32 1.0, %v849
          %v851 = vmul.f32 %v848, %v850
          %v852 = vadd.f32 %v848, %v851
          %vm853 = vweird.f32 %v818
          %vm854 = vweird.f32 %v848
          %vm855 = vmor %vm853, %vm854
          %v856 = vsel %vm855, %v848, %v852
          %v857 = vand.u32 2147483647, %v818
          %vm858 = vcmp.eq.f32.partialorder %v857, 8.507059e+37
          %v859 = vand.u32 %v818, 2147483648
          %v860 = vor.u32 1.1754944e-38, %v859
          %v861 = vsel %vm858, %v860, %v856
          %v862 = vrcp.pop %v819
          %v863 = vmul.f32 %v819, %v862
          %v864 = vsub.f32 1.0, %v863
          %v865 = vmul.f32 %v862, %v864
          %v866 = vadd.f32 %v862, %v865
          %vm867 = vweird.f32 %v819
          %vm868 = vweird.f32 %v862
          %vm869 = vmor %vm867, %vm868
          %v870 = vsel %vm869, %v862, %v866
          %v871 = vand.u32 2147483647, %v819
          %vm872 = vcmp.eq.f32.partialorder %v871, 8.507059e+37
          %v873 = vand.u32 %v819, 2147483648
          %v874 = vor.u32 1.1754944e-38, %v873
          %v875 = vsel %vm872, %v874, %v870
          %877 = vset.pattern.permute.xlu0 0
          %878 = vperm.xlu0 %877, %v833
          %v879 = vpop.permute.xlu0 %878
          %882 = vset.pattern.permute.xlu0 0
          %883 = vperm.xlu0 %882, %v847
          %v884 = vpop.permute.xlu0 %883
          %887 = vset.pattern.permute.xlu0 0
          %888 = vperm.xlu0 %887, %v861
          %v889 = vpop.permute.xlu0 %888
          %892 = vset.pattern.permute.xlu0 0
          %893 = vperm.xlu0 %892, %v875
          %v894 = vpop.permute.xlu0 %893
          %v896 = vmul.f32 %v812, %v879
          %v897 = vmul.f32 %v813, %v884
          %v898 = vmul.f32 %v814, %v889
          %v899 = vmul.f32 %v815, %v894
          %v900 = vpack.c.bf16 %v896, %v896
          %v901 = vpack.c.bf16 %v897, %v897
          %v902 = vpack.c.bf16 %v898, %v898
          %v903 = vpack.c.bf16 %v899, %v899
          %904 = vst.msk [vmem:[#allocation8] sm:$0xf] %vm468, %v900
          %906 = vrot.lane.b32.xlu0 %v901, 8
          %v907 = vpop.permute.xlu0 %906
          %vm909 = vcmask 126016
          %910 = vst.msk [vmem:[#allocation8] sm:$0xf] %vm909, %v907
          %912 = vrot.lane.b32.xlu0 %v902, 16
          %v913 = vpop.permute.xlu0 %912
          %vm915 = vcmask 191616
          %916 = vst.msk [vmem:[#allocation8] sm:$0xf] %vm915, %v913
          %918 = vrot.lane.b32.xlu0 %v903, 24
          %v919 = vpop.permute.xlu0 %918
          %vm921 = vcmask 257216
          %922 = vst.msk [vmem:[#allocation8] sm:$0xf] %vm921, %v919
          %v923 = vld [vmem:[#allocation8] sm:$0xf]
          %v924 = vld [vmem:[#allocation17] sm:$0xf]
          %v925 = vld [vmem:[#allocation17 + $0x4] sm:$0xf]
          %v926 = vld [vmem:[#allocation17 + $0x8] sm:$0xf]
          %v927 = vld [vmem:[#allocation17 + $0xc] sm:$0xf]
          %v932 = vunpack.c.l.b16 %v924
          %v933 = vunpack.c.l.b16 %v925
          %v934 = vunpack.c.l.b16 %v926
          %v935 = vunpack.c.l.b16 %v927
          %v936 = vpack.c.b16 %v933, %v932
          %v937 = vpack.c.b16 %v935, %v934
          %v941 = vsel %vm450, %v923, 0
          %943 = vmatpush.bf16.msra.mxu0 0
          %944 = vmatpush.bf16.msra.mxu0 0
          %945 = vmatpush.bf16.msra.mxu0 0
          %946 = vmatpush.bf16.msra.mxu0 0
          %947 = vmatpush.bf16.msra.mxu0 0
          %948 = vmatpush.bf16.msra.mxu0 0
          %949 = vmatpush.bf16.msra.mxu0 %v937
          %950 = vmatpush.bf16.msra.mxu0 %v936
          %951 = vmatmul.bf16.gmra.mxu0 %v941
          %v952 = vpop.f32.mrf.mxu0
          %v953 = vadd.f32 0.0, %v952
          %v954 = vpop.f32.mrf.mxu0
          %955 = vdwg.mxu0
          %956 = vst.msk [vmem:[%s358] sm:$0xff] %vm450, %v953
        $region68: #{tpu_custom_call.1} parent=39 // pred_fallthru
          _
        %s957 = sand.u32 %s174, 1
        %s958 = scalar_lea.sflag [#allocation11], %s957
        %s959 = sand.u32 %s174, 1
        %s960 = smul.addr %s959, 8
        %s961 = scalar_lea.vmem [#allocation18], %s960
        // Predicated region
        $region69: #{tpu_custom_call.1} parent=39 // pred_check
          %p962 = pneg %p184
        $region70: #{tpu_custom_call.1} parent=39 // pred_check_branch
          %964 = sbr.rel (%p962) target = $region72
        $region71: #{tpu_custom_call.1} parent=39 // pred_region
          %966 = vsyncadd %s958, 0
          %s967 = smul.addr %s31, 2
          %s968 = sadd.s32 %s32, %s967
          %s969 = smul.addr %s968, 8
          %s970 = scalar_lea.hbm %s5, %s969
          %s972 = sshll.u32 %s961, 4
          %s973 = int_to_ptr.vmem [resolvable:$true] %s972
          %s974 = sshll.u32 %s970, 4
          %s975 = int_to_ptr.hbm [resolvable:$true] %s974
          %977 = dma.vmem_to_hbm [thread:$0]  %s973, 128, %s975, %s958
        $region72: #{tpu_custom_call.1} parent=39 // pred_fallthru
          _
      $region40: #{tpu_custom_call.1} parent=5 // pred_fallthru
        _
      %p978 = scmp.le.s32.totalorder 2, %s21
      // Predicated region
      $region73: #{tpu_custom_call.1} parent=5 // pred_check
        %p979 = pneg %p978
      $region74: #{tpu_custom_call.1} parent=5 // pred_check_branch
        %981 = sbr.rel (%p979) target = $region76
      $region75: #{tpu_custom_call.1} parent=5 // pred_region
        %s982 = ssub.s32 %s21, 2
        // Predicated region
        $region77: #{tpu_custom_call.1} parent=75 // pred_check
          %p983 = pneg %p190
        $region78: #{tpu_custom_call.1} parent=75 // pred_check_branch
          %985 = sbr.rel (%p983) target = $region80
        $region79: #{tpu_custom_call.1} parent=75 // pred_region
          %s986 = sand.u32 %s175, 1
          %s987 = scalar_lea.sflag [#allocation11], %s986
          %s988 = sand.u32 %s175, 1
          %s989 = smul.addr %s988, 8
          %s990 = scalar_lea.vmem [#allocation18], %s989
          %992 = dma.done %s987, 128
        $region80: #{tpu_custom_call.1} parent=75 // pred_fallthru
          _
      $region76: #{tpu_custom_call.1} parent=5 // pred_fallthru
        _
    $region6: #{tpu_custom_call.1} parent=1 // loop_footer
      %s25 = sadd.s32 1, %s21
    $region7: #{tpu_custom_call.1} parent=1 // loop_footer_branch
      %20 = sbr.rel target = $region3
    $region8: #{tpu_custom_call.1} parent=1 // loop_exit
      _
    %993 = vsyncpa [#allocation10], 1
    %s994 = scalar_lea.sflag [#allocation10], 1
    %995 = vsyncpa %s994, 1
    %996 = vsyncpa [#allocation13], 1
    %s997 = scalar_lea.sflag [#allocation13], 1
    %998 = vsyncpa %s997, 1
    %999 = vsyncpa [#allocation16], 1
    %1000 = vsyncpa [#allocation11], 1
    %s1001 = scalar_lea.sflag [#allocation11], 1
    %1002 = vsyncpa %s1001, 1

</llo_original>
